<compile_context>
chip_gen: v7x
topology: tpu7x:2x2x1
jax: 0.10.0
libtpu: 0.0.40
codegen_flags: <defaults>
</compile_context>

<pallas_src>
import jax
import jax.numpy as jnp
from jax import lax
from jax.experimental import pallas as pl
from jax.experimental.pallas import tpu as pltpu


def _encdec_kernel(x_ref, we_ref, be_ref, wd_ref, bd_ref, o_ref):
    """Fused 1x1-conv encoder + ReLU + 1x1-conv decoder on one (nb, C, T) tile.

    x_ref : (nb, C, T) input pixels (channels on sublanes, pixels on lanes), f32
    we_ref: (L, C) encoder weight, f32
    be_ref: (L, 1) encoder bias,   f32
    wd_ref: (C, L) decoder weight, f32
    bd_ref: (C, 1) decoder bias,   f32
    o_ref : (nb, C, T) reconstructed pixels
    """
    nb, _, t = x_ref.shape

    # Sub-tile the pixel axis so the (L, chunk) f32 intermediate stays near the
    # vreg file instead of materializing a full (L, T) scratch in VMEM.
    chunk = t
    for cand in (512, 256, 128):
        if t % cand == 0:
            chunk = cand
            break
    n_chunks = t // chunk

    we = we_ref[...]
    be = be_ref[...]
    wd = wd_ref[...]
    bd = bd_ref[...]

    def process(n, off):
        xc = x_ref[n, :, pl.ds(off, chunk)]                         # (C, chunk)
        # Encoder: (L, C) @ (C, chunk) -> (L, chunk), f32 accumulation on MXU.
        z = jnp.dot(we, xc, preferred_element_type=jnp.float32) + be
        z = jnp.maximum(z, 0.0)
        # Decoder: (C, L) @ (L, chunk) -> (C, chunk)
        y = jnp.dot(wd, z, preferred_element_type=jnp.float32) + bd
        o_ref[n, :, pl.ds(off, chunk)] = y.astype(o_ref.dtype)

    for n in range(nb):                      # nb is small (<= 8) and static
        if n_chunks == 1:
            process(n, 0)
        else:
            def body(i, carry, n=n):
                process(n, pl.multiple_of(i * chunk, 128))
                return carry
            lax.fori_loop(0, n_chunks, body, 0,
                          unroll=True if n_chunks <= 8 else 8)


def _vmem_plan():
    """Generation-aware (budget_bytes, vmem_limit_bytes)."""
    cap = None
    try:
        cap = getattr(pltpu.get_tpu_info(), "vmem_capacity_bytes", None)
    except Exception:  # pragma: no cover - conservative fallback
        cap = None
    if cap is None:
        cap = 128 << 20
    if cap >= (100 << 20):            # v5e / v6e: 128 MiB physical VMEM
        return 48 << 20, 64 << 20
    return 24 << 20, 32 << 20         # v7x: 64 MiB physical VMEM


def _largest_aligned_divisor(total, cap, align=128):
    """Largest multiple of `align` that divides `total` (a multiple of align)
    and is <= cap."""
    m = total // align
    cap_units = max(1, cap // align)
    best, d = 1, 1
    while d * d <= m:
        if m % d == 0:
            for q in (d, m // d):
                if q <= cap_units:
                    best = max(best, q)
        d += 1
    return best * align


def _largest_divisor_leq(n, cap):
    for d in range(min(n, max(1, cap)), 0, -1):
        if n % d == 0:
            return d
    return 1


def _plan_tiling(N, C, HW_pad, L, budget_bytes, *, max_tile=32768, max_nb=8):
    """Pick (tile_pix, nb): lane-dense tiles that divide exactly and fit VMEM.

    Budget counts double-buffered f32 in+out tiles, the resident weights and
    (lane-padded) biases, and the live (L, chunk<=512) intermediates.
    """
    bytes_per_col = 2 * 2 * C * 4                    # in+out, double-buffered
    fixed = 2 * L * C * 4 + 2 * (L + C) * 128 * 4    # weights + padded biases
    chunk_scratch = 2 * L * 512 * 4                  # live (L, chunk) values
    avail = max(budget_bytes - fixed - chunk_scratch, 128 * bytes_per_col)
    cap = min(max_tile, max(128, avail // bytes_per_col))
    tile_pix = HW_pad if HW_pad <= cap else _largest_aligned_divisor(HW_pad, cap)
    per_image = 2 * 2 * C * tile_pix * 4
    nb = _largest_divisor_leq(N, min(max_nb, max(1, avail // per_image)))
    return tile_pix, nb


def encoder_decoder(x_nchw, w_enc, b_enc, w_dec, b_dec):
    """Fused SpaceEncoder + SpaceDecoder forward.

    x_nchw : (N, C, H, W) float32
    w_enc  : (L, C) encoder 1x1-conv weight (PyTorch (L, C, 1, 1) squeezed)
    b_enc  : (L,)
    w_dec  : (C, L) decoder 1x1-conv weight (PyTorch (C, L, 1, 1) squeezed)
    b_dec  : (C,)
    returns (N, C, H, W) float32
    """
    N, C, H, W = x_nchw.shape
    L = w_enc.shape[0]
    HW = H * W

    budget, vmem_limit = _vmem_plan()

    # Channels-major view (N, C, H*W): pixels map to the 128-lane axis; pure
    # reshape, no extra HBM pass.
    x_rows = x_nchw.reshape(N, C, HW)

    # Pad the pixel axis once to a lane multiple so every tile is unmasked.
    HW_pad = ((HW + 127) // 128) * 128
    if HW_pad != HW:
        x_rows = jnp.pad(x_rows, ((0, 0), (0, 0), (0, HW_pad - HW)))

    tile_pix, nb = _plan_tiling(N, C, HW_pad, L, budget)
    # Pixel-tile axis first so the megacore-sharded parallel dim has extent > 1
    # even for tiny N (v7x); both axes independent -> "parallel".
    grid = (HW_pad // tile_pix, N // nb)

    we = w_enc.astype(jnp.float32)                  # (L, C)
    wd = w_dec.astype(jnp.float32)                  # (C, L)
    be = b_enc.reshape(L, 1).astype(jnp.float32)    # (L, 1)
    bd = b_dec.reshape(C, 1).astype(jnp.float32)    # (C, 1)

    cost = pl.CostEstimate(
        flops=4 * N * HW_pad * L * C,
        transcendentals=0,
        bytes_accessed=2 * N * C * HW_pad * 4 + (2 * L * C + L + C) * 4,
    )

    out = pl.pallas_call(
        _encdec_kernel,
        out_shape=jax.ShapeDtypeStruct((N, C, HW_pad), x_nchw.dtype),
        grid_spec=pltpu.PrefetchScalarGridSpec(
            num_scalar_prefetch=0,
            grid=grid,
            in_specs=[
                pl.BlockSpec((nb, C, tile_pix), lambda p, b: (b, 0, p)),  # x
                pl.BlockSpec((L, C), lambda p, b: (0, 0)),                # enc W
                pl.BlockSpec((L, 1), lambda p, b: (0, 0)),                # enc b
                pl.BlockSpec((C, L), lambda p, b: (0, 0)),                # dec W
                pl.BlockSpec((C, 1), lambda p, b: (0, 0)),                # dec b
            ],
            out_specs=pl.BlockSpec((nb, C, tile_pix), lambda p, b: (b, 0, p)),
        ),
        compiler_params=pltpu.CompilerParams(
            dimension_semantics=("parallel", "parallel"),
            vmem_limit_bytes=vmem_limit,
        ),
        cost_estimate=cost,
    )(x_rows, we, be, wd, bd)

    if HW_pad != HW:
        out = out[:, :, :HW]
    return out.reshape(N, C, H, W)


def _reference(x_nchw, w_enc, b_enc, w_dec, b_dec):
    """Plain-JAX f32 reference (same math: NCHW 1x1 convs)."""
    z = jnp.einsum('nchw,lc->nlhw', x_nchw, w_enc) + b_enc[None, :, None, None]
    z = jnp.maximum(z, 0.0)
    y = jnp.einsum('nlhw,cl->nchw', z, w_dec) + b_dec[None, :, None, None]
    return y


if __name__ == "__main__":
    # Small shapes consistent with the module's forward.
    N, C, H, W = 2, 4, 16, 16
    latent_dim = 32

    key = jax.random.PRNGKey(0)
    kx, ke, kbe, kd, kbd = jax.random.split(key, 5)

    x = jax.random.normal(kx, (N, C, H, W), dtype=jnp.float32)
    # Deterministic synthetic parameters (shapes match the PyTorch 1x1 convs).
    w_enc = jax.random.normal(ke, (latent_dim, C), dtype=jnp.float32) * 0.1
    b_enc = jax.random.normal(kbe, (latent_dim,), dtype=jnp.float32) * 0.01
    w_dec = jax.random.normal(kd, (C, latent_dim), dtype=jnp.float32) * 0.1
    b_dec = jax.random.normal(kbd, (C,), dtype=jnp.float32) * 0.01

    out = encoder_decoder(x, w_enc, b_enc, w_dec, b_dec)
    out = jax.block_until_ready(out)

    ref = _reference(x, w_enc, b_enc, w_dec, b_dec)
    assert out.shape == (N, C, H, W)
    # All-f32 math in the kernel -> tight tolerance.
    assert jnp.allclose(out, ref, atol=1e-4, rtol=1e-4), float(
        jnp.max(jnp.abs(out - ref)))

    print("KERNEL_OK")
</pallas_src>

<mosaic_0001>
module attributes {stable_mosaic.version = 11 : i64} {
  func.func @_encdec_kernel(%arg0: i32, %arg1: i32, %arg2: memref<2x4x256xf32, #tpu.memory_space<vmem>>, %arg3: memref<32x4xf32, #tpu.memory_space<vmem>>, %arg4: memref<32x1xf32, #tpu.memory_space<vmem>>, %arg5: memref<4x32xf32, #tpu.memory_space<vmem>>, %arg6: memref<4x1xf32, #tpu.memory_space<vmem>>, %arg7: memref<2x4x256xf32, #tpu.memory_space<vmem>>) attributes {dimension_semantics = [#tpu.dimension_semantics<parallel>, #tpu.dimension_semantics<parallel>], iteration_bounds = array<i64: 1, 1>, scalar_prefetch = 0 : i64, scratch_operands = 0 : i64, tpu.core_type = #tpu.core_type<tc>, window_params = [{transform_indices = @transform_0, window_bounds = array<i64: 2, 4, 256>}, {pipeline_mode = #tpu.pipeline_mode<synchronous>, transform_indices = @transform_1, window_bounds = array<i64: 32, 4>}, {pipeline_mode = #tpu.pipeline_mode<synchronous>, transform_indices = @transform_2, window_bounds = array<i64: 32, 1>}, {pipeline_mode = #tpu.pipeline_mode<synchronous>, transform_indices = @transform_3, window_bounds = array<i64: 4, 32>}, {pipeline_mode = #tpu.pipeline_mode<synchronous>, transform_indices = @transform_4, window_bounds = array<i64: 4, 1>}, {transform_indices = @transform_5, window_bounds = array<i64: 2, 4, 256>}]} {
    %c0 = arith.constant 0 : index
    %c0_0 = arith.constant 0 : index
    %0 = vector.load %arg3[%c0, %c0_0] : memref<32x4xf32, #tpu.memory_space<vmem>>, vector<32x4xf32>
    %c0_1 = arith.constant 0 : index
    %c0_2 = arith.constant 0 : index
    %1 = vector.load %arg4[%c0_1, %c0_2] : memref<32x1xf32, #tpu.memory_space<vmem>>, vector<32x1xf32>
    %c0_3 = arith.constant 0 : index
    %c0_4 = arith.constant 0 : index
    %2 = vector.load %arg5[%c0_3, %c0_4] : memref<4x32xf32, #tpu.memory_space<vmem>>, vector<4x32xf32>
    %c0_5 = arith.constant 0 : index
    %c0_6 = arith.constant 0 : index
    %3 = vector.load %arg6[%c0_5, %c0_6] : memref<4x1xf32, #tpu.memory_space<vmem>>, vector<4x1xf32>
    %c0_7 = arith.constant 0 : index
    %c0_8 = arith.constant 0 : index
    %c0_9 = arith.constant 0 : index
    %4 = vector.load %arg2[%c0_7, %c0_8, %c0_9] : memref<2x4x256xf32, #tpu.memory_space<vmem>>, vector<1x4x256xf32>
    %5 = vector.shape_cast %4 : vector<1x4x256xf32> to vector<4x256xf32>
    %cst = arith.constant dense<0.000000e+00> : vector<32x256xf32>
    %6 = tpu.matmul %0, %5, %cst {dimension_numbers = #tpu.dot_dimension_numbers<[1], [0], [0], [1], [0, 0, 1, 1], [], []>} : vector<32x4xf32>, vector<4x256xf32>, vector<32x256xf32> -> vector<32x256xf32>
    %7 = vector.broadcast %1 : vector<32x1xf32> to vector<32x256xf32>
    %8 = arith.addf %6, %7 : vector<32x256xf32>
    %cst_10 = arith.constant 0.000000e+00 : f32
    %9 = vector.broadcast %cst_10 : f32 to vector<32x256xf32>
    %10 = arith.maximumf %8, %9 : vector<32x256xf32>
    %cst_11 = arith.constant dense<0.000000e+00> : vector<4x256xf32>
    %11 = tpu.matmul %2, %10, %cst_11 {dimension_numbers = #tpu.dot_dimension_numbers<[1], [0], [0], [1], [0, 0, 1, 1], [], []>} : vector<4x32xf32>, vector<32x256xf32>, vector<4x256xf32> -> vector<4x256xf32>
    %12 = vector.broadcast %3 : vector<4x1xf32> to vector<4x256xf32>
    %13 = arith.addf %11, %12 : vector<4x256xf32>
    %c0_12 = arith.constant 0 : index
    %c0_13 = arith.constant 0 : index
    %c0_14 = arith.constant 0 : index
    %14 = vector.load %arg7[%c0_12, %c0_13, %c0_14] : memref<2x4x256xf32, #tpu.memory_space<vmem>>, vector<1x4x256xf32>
    %15 = vector.shape_cast %14 : vector<1x4x256xf32> to vector<4x256xf32>
    %16 = vector.shape_cast %13 : vector<4x256xf32> to vector<1x4x256xf32>
    tpu.vector_store %arg7[%c0_12, %c0_13, %c0_14], %16 {strides = array<i32>} : memref<2x4x256xf32, #tpu.memory_space<vmem>>, vector<1x4x256xf32>,
    %c1 = arith.constant 1 : index
    %c0_15 = arith.constant 0 : index
    %c0_16 = arith.constant 0 : index
    %17 = vector.load %arg2[%c1, %c0_15, %c0_16] : memref<2x4x256xf32, #tpu.memory_space<vmem>>, vector<1x4x256xf32>
    %18 = vector.shape_cast %17 : vector<1x4x256xf32> to vector<4x256xf32>
    %cst_17 = arith.constant dense<0.000000e+00> : vector<32x256xf32>
    %19 = tpu.matmul %0, %18, %cst_17 {dimension_numbers = #tpu.dot_dimension_numbers<[1], [0], [0], [1], [0, 0, 1, 1], [], []>} : vector<32x4xf32>, vector<4x256xf32>, vector<32x256xf32> -> vector<32x256xf32>
    %20 = vector.broadcast %1 : vector<32x1xf32> to vector<32x256xf32>
    %21 = arith.addf %19, %20 : vector<32x256xf32>
    %cst_18 = arith.constant 0.000000e+00 : f32
    %22 = vector.broadcast %cst_18 : f32 to vector<32x256xf32>
    %23 = arith.maximumf %21, %22 : vector<32x256xf32>
    %cst_19 = arith.constant dense<0.000000e+00> : vector<4x256xf32>
    %24 = tpu.matmul %2, %23, %cst_19 {dimension_numbers = #tpu.dot_dimension_numbers<[1], [0], [0], [1], [0, 0, 1, 1], [], []>} : vector<4x32xf32>, vector<32x256xf32>, vector<4x256xf32> -> vector<4x256xf32>
    %25 = vector.broadcast %3 : vector<4x1xf32> to vector<4x256xf32>
    %26 = arith.addf %24, %25 : vector<4x256xf32>
    %c1_20 = arith.constant 1 : index
    %c0_21 = arith.constant 0 : index
    %c0_22 = arith.constant 0 : index
    %27 = vector.load %arg7[%c1_20, %c0_21, %c0_22] : memref<2x4x256xf32, #tpu.memory_space<vmem>>, vector<1x4x256xf32>
    %28 = vector.shape_cast %27 : vector<1x4x256xf32> to vector<4x256xf32>
    %29 = vector.shape_cast %26 : vector<4x256xf32> to vector<1x4x256xf32>
    tpu.vector_store %arg7[%c1_20, %c0_21, %c0_22], %29 {strides = array<i32>} : memref<2x4x256xf32, #tpu.memory_space<vmem>>, vector<1x4x256xf32>,
    return
  }
  func.func @transform_0(%arg0: i32, %arg1: i32) -> (i32, i32, i32) {
    %c0_i32 = arith.constant 0 : i32
    %c0_i32_0 = arith.constant 0 : i32
    return %arg1, %c0_i32, %arg0 : i32, i32, i32
  }
  func.func @transform_1(%arg0: i32, %arg1: i32) -> (i32, i32) {
    %c0_i32 = arith.constant 0 : i32
    %c0_i32_0 = arith.constant 0 : i32
    %c0_i32_1 = arith.constant 0 : i32
    return %c0_i32, %c0_i32_0 : i32, i32
  }
  func.func @transform_2(%arg0: i32, %arg1: i32) -> (i32, i32) {
    %c0_i32 = arith.constant 0 : i32
    %c0_i32_0 = arith.constant 0 : i32
    %c0_i32_1 = arith.constant 0 : i32
    return %c0_i32, %c0_i32_0 : i32, i32
  }
  func.func @transform_3(%arg0: i32, %arg1: i32) -> (i32, i32) {
    %c0_i32 = arith.constant 0 : i32
    %c0_i32_0 = arith.constant 0 : i32
    %c0_i32_1 = arith.constant 0 : i32
    return %c0_i32, %c0_i32_0 : i32, i32
  }
  func.func @transform_4(%arg0: i32, %arg1: i32) -> (i32, i32) {
    %c0_i32 = arith.constant 0 : i32
    %c0_i32_0 = arith.constant 0 : i32
    %c0_i32_1 = arith.constant 0 : i32
    return %c0_i32, %c0_i32_0 : i32, i32
  }
  func.func @transform_5(%arg0: i32, %arg1: i32) -> (i32, i32, i32) {
    %c0_i32 = arith.constant 0 : i32
    %c0_i32_0 = arith.constant 0 : i32
    return %arg1, %c0_i32, %arg0 : i32, i32, i32
  }
}

</mosaic_0001>

<llo_original>
// kernel: tpu_custom_call.1
$region0: #{tpu_custom_call.1}
  #allocation0 [shape = 'u32[]', space=smem, size = 0x4, offset = 0x4, fixed_abs, tag = 'smem constant byte address 0x4 - core index']
  #allocation1 [shape = 'u32[144,128]{1,0:T(1,128)}', space=vmem, size = 0x12000, scoped, tag = 'internal scratch']
  %s0 = inlined_call_operand.hbm [shape: f32[2,4,256], index: 0, kind: input, shape index: {}]
  %s1 = inlined_call_operand.hbm [shape: f32[32,4], index: 1, kind: input, shape index: {}]
  %s2 = inlined_call_operand.hbm [shape: f32[32,1], index: 2, kind: input, shape index: {}]
  %s3 = inlined_call_operand.hbm [shape: f32[4,32], index: 3, kind: input, shape index: {}]
  %s4 = inlined_call_operand.hbm [shape: f32[4,1], index: 4, kind: input, shape index: {}]
  %s5 = inlined_call_operand.hbm [shape: f32[2,4,256], index: 5, kind: output, shape index: {}]
  %s6 = sld [smem:[#allocation0]]
  $region50: #{tpu_custom_call.1} parent=0
    _
  %s8 = ssub.s32 1, %s6
  %s9 = scalar_select 0, %s8, %s6
  $region1: #{tpu_custom_call.1} parent=0
    #allocation2 [shape = 'u8[8192]{0}', space=vmem, size = 0x2000, scoped, tag = 'input window, operand 0, single buffered']
    #allocation3 [shape = 's32[1]{0}', space=sflag, size = 0x4, scoped, tag = 'scoped memory for tpu_custom_call.1']
    #allocation4 [shape = 's32[1]{0}', space=sflag, size = 0x4, scoped, tag = 'scoped memory for tpu_custom_call.1']
    #allocation5 [shape = 'u8[16384]{0}', space=vmem, size = 0x4000, scoped, tag = 'input window, operand 1, single buffered']
    #allocation6 [shape = 's32[1]{0}', space=sflag, size = 0x4, scoped, tag = 'scoped memory for tpu_custom_call.1']
    #allocation7 [shape = 'u8[16384]{0}', space=vmem, size = 0x4000, scoped, tag = 'input window, operand 2, single buffered']
    #allocation8 [shape = 'u8[2048]{0}', space=vmem, size = 0x800, scoped, tag = 'input window, operand 3, single buffered']
    #allocation9 [shape = 's32[1]{0}', space=sflag, size = 0x4, scoped, tag = 'scoped memory for tpu_custom_call.1']
    #allocation10 [shape = 'u8[2048]{0}', space=vmem, size = 0x800, scoped, tag = 'input window, operand 4, single buffered']
    #allocation11 [shape = 'u8[8192]{0}', space=vmem, size = 0x2000, scoped, tag = 'output window, operand 0, single buffered']
    %10 = vsyncpa [#allocation3], 0
    %11 = vsyncpa [#allocation6], 0
    %12 = vsyncpa [#allocation9], 0
    %13 = vsyncpa [#allocation4], 0
    // Predicated region
    $region2: #{tpu_custom_call.1} parent=1 // pred_check
      _
    $region3: #{tpu_custom_call.1} parent=1 // pred_check_branch
      %15 = sbr.rel (0) target = $region5
    $region4: #{tpu_custom_call.1} parent=1 // pred_region
      %s17 = ssub.s32 256, 256
      %18 = vsyncadd [#allocation3], %s17
      %s19 = sshll.u32 [#allocation2], 4
      %s20 = int_to_ptr.vmem [resolvable:$true] %s19
      %25 = dma.hbm_to_vmem [thread:$0]  %s0, 256, %s20, [#allocation3], 128, 128, 8
    $region5: #{tpu_custom_call.1} parent=1 // pred_fallthru
      _
    // Predicated region
    $region6: #{tpu_custom_call.1} parent=1 // pred_check
      _
    $region7: #{tpu_custom_call.1} parent=1 // pred_check_branch
      %27 = sbr.rel (0) target = $region9
    $region8: #{tpu_custom_call.1} parent=1 // pred_region
      %s29 = ssub.s32 512, 512
      %30 = vsyncadd [#allocation6], %s29
      %s31 = sshll.u32 [#allocation5], 4
      %s32 = int_to_ptr.vmem [resolvable:$true] %s31
      %37 = dma.hbm_to_vmem [thread:$0]  %s1, 512, %s32, [#allocation6], 128, 128, 8
    $region9: #{tpu_custom_call.1} parent=1 // pred_fallthru
      _
    // Predicated region
    $region10: #{tpu_custom_call.1} parent=1 // pred_check
      _
    $region11: #{tpu_custom_call.1} parent=1 // pred_check_branch
      %39 = sbr.rel (0) target = $region13
    $region12: #{tpu_custom_call.1} parent=1 // pred_region
      %s41 = ssub.s32 512, 512
      %42 = vsyncadd [#allocation6], %s41
      %s43 = sshll.u32 [#allocation7], 4
      %s44 = int_to_ptr.vmem [resolvable:$true] %s43
      %49 = dma.hbm_to_vmem [thread:$0]  %s2, 512, %s44, [#allocation6], 128, 128, 8
    $region13: #{tpu_custom_call.1} parent=1 // pred_fallthru
      _
    // Predicated region
    $region14: #{tpu_custom_call.1} parent=1 // pred_check
      _
    $region15: #{tpu_custom_call.1} parent=1 // pred_check_branch
      %51 = sbr.rel (0) target = $region17
    $region16: #{tpu_custom_call.1} parent=1 // pred_region
      %s53 = ssub.s32 64, 64
      %54 = vsyncadd [#allocation9], %s53
      %s56 = sshll.u32 [#allocation8], 4
      %s57 = int_to_ptr.vmem [resolvable:$true] %s56
      %59 = dma.hbm_to_vmem [thread:$0]  %s3, 64, %s57, [#allocation9]
    $region17: #{tpu_custom_call.1} parent=1 // pred_fallthru
      _
    // Predicated region
    $region18: #{tpu_custom_call.1} parent=1 // pred_check
      _
    $region19: #{tpu_custom_call.1} parent=1 // pred_check_branch
      %61 = sbr.rel (0) target = $region21
    $region20: #{tpu_custom_call.1} parent=1 // pred_region
      %s63 = ssub.s32 64, 64
      %64 = vsyncadd [#allocation9], %s63
      %s66 = sshll.u32 [#allocation10], 4
      %s67 = int_to_ptr.vmem [resolvable:$true] %s66
      %69 = dma.hbm_to_vmem [thread:$0]  %s4, 64, %s67, [#allocation9]
    $region21: #{tpu_custom_call.1} parent=1 // pred_fallthru
      _
    // Predicated region
    $region22: #{tpu_custom_call.1} parent=1 // pred_check
      _
    $region23: #{tpu_custom_call.1} parent=1 // pred_check_branch
      %71 = sbr.rel (0) target = $region25
    $region24: #{tpu_custom_call.1} parent=1 // pred_region
      %72 = dma.done [#allocation3], 256
    $region25: #{tpu_custom_call.1} parent=1 // pred_fallthru
      _
    // Predicated region
    $region26: #{tpu_custom_call.1} parent=1 // pred_check
      _
    $region27: #{tpu_custom_call.1} parent=1 // pred_check_branch
      %74 = sbr.rel (0) target = $region29
    $region28: #{tpu_custom_call.1} parent=1 // pred_region
      %75 = dma.done [#allocation6], 512
    $region29: #{tpu_custom_call.1} parent=1 // pred_fallthru
      _
    // Predicated region
    $region30: #{tpu_custom_call.1} parent=1 // pred_check
      _
    $region31: #{tpu_custom_call.1} parent=1 // pred_check_branch
      %77 = sbr.rel (0) target = $region33
    $region32: #{tpu_custom_call.1} parent=1 // pred_region
      %78 = dma.done [#allocation6], 512
    $region33: #{tpu_custom_call.1} parent=1 // pred_fallthru
      _
    // Predicated region
    $region34: #{tpu_custom_call.1} parent=1 // pred_check
      _
    $region35: #{tpu_custom_call.1} parent=1 // pred_check_branch
      %80 = sbr.rel (0) target = $region37
    $region36: #{tpu_custom_call.1} parent=1 // pred_region
      %81 = dma.done [#allocation9], 64
    $region37: #{tpu_custom_call.1} parent=1 // pred_fallthru
      _
    // Predicated region
    $region38: #{tpu_custom_call.1} parent=1 // pred_check
      _
    $region39: #{tpu_custom_call.1} parent=1 // pred_check_branch
      %83 = sbr.rel (0) target = $region41
    $region40: #{tpu_custom_call.1} parent=1 // pred_region
      %84 = dma.done [#allocation9], 64
    $region41: #{tpu_custom_call.1} parent=1 // pred_fallthru
      _
    %v85 = vld [vmem:[#allocation5] sm:$0xff]
    %v86 = vld [vmem:[#allocation5 + $0x8] sm:$0xff]
    %v87 = vld [vmem:[#allocation5 + $0x10] sm:$0xff]
    %v88 = vld [vmem:[#allocation5 + $0x18] sm:$0xff]
    %v89 = vld [vmem:[#allocation7] sm:$0xff]
    %v90 = vld [vmem:[#allocation7 + $0x8] sm:$0xff]
    %v91 = vld [vmem:[#allocation7 + $0x10] sm:$0xff]
    %v92 = vld [vmem:[#allocation7 + $0x18] sm:$0xff]
    %v93 = vld [vmem:[#allocation8] sm:$0xf]
    %v94 = vld [vmem:[#allocation10] sm:$0xf]
    %v95 = vld [vmem:[#allocation2] sm:$0xff]
    %97 = vset.pattern.permute.xlu0 0
    %98 = vperm.xlu0 %97, %v89
    %v99 = vpop.permute.xlu0 %98
    %102 = vset.pattern.permute.xlu0 0
    %103 = vperm.xlu0 %102, %v90
    %v104 = vpop.permute.xlu0 %103
    %107 = vset.pattern.permute.xlu0 0
    %108 = vperm.xlu0 %107, %v91
    %v109 = vpop.permute.xlu0 %108
    %112 = vset.pattern.permute.xlu0 0
    %113 = vperm.xlu0 %112, %v92
    %v114 = vpop.permute.xlu0 %113
    %v117 = vcombine.high %v95, %v95
    %vm118 = vcmask 31744
    %v120 = vsel %vm118, %v85, 0
    %v123 = vsel %vm118, %v86, 0
    %v126 = vsel %vm118, %v87, 0
    %v129 = vsel %vm118, %v88, 0
    %vm131 = vcmask 1043456
    %v132 = vsel %vm131, %v95, 0
    %v134 = vsel %vm131, %v117, 0
    %136 = vmatprep.subr.mxu0 %v134
    %137 = vmatpush1.msra.mxu0 %v132
    %138 = vmatprep.subr.mxu0 0.0
    %139 = vmatpush1.msra.mxu0 0.0
    %140 = vmatprep.subr.mxu0 0.0
    %141 = vmatpush1.msra.mxu0 0.0
    %142 = vmatprep.subr.mxu0 0.0
    %143 = vmatpush1.msra.mxu0 0.0
    %144 = vmatprep.subr.mxu0 0.0
    %145 = vmatpush1.msra.mxu0 0.0
    %146 = vmatprep.subr.mxu0 0.0
    %147 = vmatpush1.msra.mxu0 0.0
    %148 = vmatprep.subr.mxu0 0.0
    %149 = vmatpush1.msra.mxu0 0.0
    %150 = vmatprep.subr.mxu0 0.0
    %151 = vmatpush1.msra.mxu0 0.0
    %152 = vmatprep.subr.mxu0 0.0
    %153 = vmatpush1.msra.mxu0 0.0
    %154 = vmatprep.subr.mxu0 0.0
    %155 = vmatpush1.msra.mxu0 0.0
    %156 = vmatprep.subr.mxu0 0.0
    %157 = vmatpush1.msra.mxu0 0.0
    %158 = vmatprep.subr.mxu0 0.0
    %159 = vmatpush1.msra.mxu0 0.0
    %160 = vmatprep.subr.mxu0 0.0
    %161 = vmatpush1.msra.mxu0 0.0
    %162 = vmatprep.subr.mxu0 0.0
    %163 = vmatpush1.msra.mxu0 0.0
    %164 = vmatprep.subr.mxu0 0.0
    %165 = vmatpush1.msra.mxu0 0.0
    %166 = vmatprep.subr.mxu0 0.0
    %167 = vmatpush1.msra.mxu0 0.0
    %168 = vmatprep.subr.mxu0 0.0
    %169 = vmatpush1.msra.mxu0 0.0
    %170 = vmatprep.subr.mxu0 0.0
    %171 = vmatpush1.msra.mxu0 0.0
    %172 = vmatprep.subr.mxu0 0.0
    %173 = vmatpush1.msra.mxu0 0.0
    %174 = vmatprep.subr.mxu0 0.0
    %175 = vmatpush1.msra.mxu0 0.0
    %176 = vmatprep.subr.mxu0 0.0
    %177 = vmatpush1.msra.mxu0 0.0
    %178 = vmatprep.subr.mxu0 0.0
    %179 = vmatpush1.msra.mxu0 0.0
    %180 = vmatprep.subr.mxu0 0.0
    %181 = vmatpush1.msra.mxu0 0.0
    %182 = vmatprep.subr.mxu0 0.0
    %183 = vmatpush1.msra.mxu0 0.0
    %184 = vmatprep.subr.mxu0 0.0
    %185 = vmatpush1.msra.mxu0 0.0
    %186 = vmatprep.subr.mxu0 0.0
    %187 = vmatpush1.msra.mxu0 0.0
    %188 = vmatprep.subr.mxu0 0.0
    %189 = vmatpush1.msra.mxu0 0.0
    %190 = vmatprep.subr.mxu0 0.0
    %191 = vmatpush1.msra.mxu0 0.0
    %192 = vmatprep.subr.mxu0 0.0
    %193 = vmatpush1.msra.mxu0 0.0
    %194 = vmatprep.subr.mxu0 0.0
    %195 = vmatpush1.msra.mxu0 0.0
    %196 = vmatprep.subr.mxu0 0.0
    %197 = vmatpush1.msra.mxu0 0.0
    %198 = vmatprep.subr.mxu0 0.0
    %199 = vmatpush1.msra.mxu0 0.0
    %200 = vmatprep.mubr.f32.mxu0 0.0
    %201 = vmatmul.mubr.f32.gmra.mrb[0].mxu0 %v120
    %v202 = vpop.f32.mrb[0].mxu0
    %v203 = vadd.f32 %v99, %v202
    %v204 = vpop.f32.mrb[0].mxu0
    %v205 = vadd.f32 %v99, %v204
    %206 = vmatprep.mubr.f32.mxu0 0.0
    %207 = vmatmul.mubr.f32.gmra.mrb[0].mxu0 %v123
    %v208 = vpop.f32.mrb[0].mxu0
    %v209 = vadd.f32 %v104, %v208
    %v210 = vpop.f32.mrb[0].mxu0
    %v211 = vadd.f32 %v104, %v210
    %212 = vmatprep.mubr.f32.mxu0 0.0
    %213 = vmatmul.mubr.f32.gmra.mrb[0].mxu0 %v126
    %v214 = vpop.f32.mrb[0].mxu0
    %v215 = vadd.f32 %v109, %v214
    %v216 = vpop.f32.mrb[0].mxu0
    %v217 = vadd.f32 %v109, %v216
    %218 = vmatprep.mubr.f32.mxu0 0.0
    %219 = vmatmul.mubr.f32.gmra.mrb[0].mxu0 %v129
    %v220 = vpop.f32.mrb[0].mxu0
    %v221 = vadd.f32 %v114, %v220
    %v222 = vpop.f32.mrb[0].mxu0
    %v223 = vadd.f32 %v114, %v222
    %224 = vdwg.mxu0
    %v225 = vmax.f32 %v203, 0.0
    %v226 = vmax.f32 %v205, 0.0
    %v227 = vmax.f32 %v209, 0.0
    %v228 = vmax.f32 %v211, 0.0
    %v229 = vmax.f32 %v215, 0.0
    %v230 = vmax.f32 %v217, 0.0
    %v231 = vmax.f32 %v221, 0.0
    %v232 = vmax.f32 %v223, 0.0
    %234 = vset.pattern.permute.xlu0 0
    %235 = vperm.xlu0 %234, %v94
    %v236 = vpop.permute.xlu0 %235
    %vm238 = vcmask 261120
    %v240 = vsel %vm238, %v93, 0
    %242 = vmatprep.subr.mxu0 %v226
    %243 = vmatpush1.msra.mxu0 %v225
    %244 = vmatprep.subr.mxu0 %v228
    %245 = vmatpush1.msra.mxu0 %v227
    %246 = vmatprep.subr.mxu0 %v230
    %247 = vmatpush1.msra.mxu0 %v229
    %248 = vmatprep.subr.mxu0 %v232
    %249 = vmatpush1.msra.mxu0 %v231
    %250 = vmatprep.subr.mxu0 0.0
    %251 = vmatpush1.msra.mxu0 0.0
    %252 = vmatprep.subr.mxu0 0.0
    %253 = vmatpush1.msra.mxu0 0.0
    %254 = vmatprep.subr.mxu0 0.0
    %255 = vmatpush1.msra.mxu0 0.0
    %256 = vmatprep.subr.mxu0 0.0
    %257 = vmatpush1.msra.mxu0 0.0
    %258 = vmatprep.subr.mxu0 0.0
    %259 = vmatpush1.msra.mxu0 0.0
    %260 = vmatprep.subr.mxu0 0.0
    %261 = vmatpush1.msra.mxu0 0.0
    %262 = vmatprep.subr.mxu0 0.0
    %263 = vmatpush1.msra.mxu0 0.0
    %264 = vmatprep.subr.mxu0 0.0
    %265 = vmatpush1.msra.mxu0 0.0
    %266 = vmatprep.subr.mxu0 0.0
    %267 = vmatpush1.msra.mxu0 0.0
    %268 = vmatprep.subr.mxu0 0.0
    %269 = vmatpush1.msra.mxu0 0.0
    %270 = vmatprep.subr.mxu0 0.0
    %271 = vmatpush1.msra.mxu0 0.0
    %272 = vmatprep.subr.mxu0 0.0
    %273 = vmatpush1.msra.mxu0 0.0
    %274 = vmatprep.subr.mxu0 0.0
    %275 = vmatpush1.msra.mxu0 0.0
    %276 = vmatprep.subr.mxu0 0.0
    %277 = vmatpush1.msra.mxu0 0.0
    %278 = vmatprep.subr.mxu0 0.0
    %279 = vmatpush1.msra.mxu0 0.0
    %280 = vmatprep.subr.mxu0 0.0
    %281 = vmatpush1.msra.mxu0 0.0
    %282 = vmatprep.subr.mxu0 0.0
    %283 = vmatpush1.msra.mxu0 0.0
    %284 = vmatprep.subr.mxu0 0.0
    %285 = vmatpush1.msra.mxu0 0.0
    %286 = vmatprep.subr.mxu0 0.0
    %287 = vmatpush1.msra.mxu0 0.0
    %288 = vmatprep.subr.mxu0 0.0
    %289 = vmatpush1.msra.mxu0 0.0
    %290 = vmatprep.subr.mxu0 0.0
    %291 = vmatpush1.msra.mxu0 0.0
    %292 = vmatprep.subr.mxu0 0.0
    %293 = vmatpush1.msra.mxu0 0.0
    %294 = vmatprep.subr.mxu0 0.0
    %295 = vmatpush1.msra.mxu0 0.0
    %296 = vmatprep.subr.mxu0 0.0
    %297 = vmatpush1.msra.mxu0 0.0
    %298 = vmatprep.subr.mxu0 0.0
    %299 = vmatpush1.msra.mxu0 0.0
    %300 = vmatprep.subr.mxu0 0.0
    %301 = vmatpush1.msra.mxu0 0.0
    %302 = vmatprep.subr.mxu0 0.0
    %303 = vmatpush1.msra.mxu0 0.0
    %304 = vmatprep.subr.mxu0 0.0
    %305 = vmatpush1.msra.mxu0 0.0
    %306 = vmatprep.mubr.f32.mxu0 0.0
    %307 = vmatmul.mubr.f32.gmra.mrb[0].mxu0 %v240
    %v308 = vpop.f32.mrb[0].mxu0
    %v309 = vadd.f32 %v236, %v308
    %v310 = vpop.f32.mrb[0].mxu0
    %v311 = vadd.f32 %v236, %v310
    %312 = vdwg.mxu0
    %v315 = vcombine.low %v309, %v311
    %317 = vst [vmem:[#allocation11] sm:$0xff] %v315
    %s318 = scalar_lea.vmem [#allocation2], 8
    %v319 = vld [vmem:[%s318] sm:$0xff]
    %v321 = vcombine.high %v319, %v319
    %v322 = vsel %vm131, %v319, 0
    %v324 = vsel %vm131, %v321, 0
    %326 = vmatprep.subr.mxu0 %v324
    %327 = vmatpush1.msra.mxu0 %v322
    %328 = vmatprep.subr.mxu0 0.0
    %329 = vmatpush1.msra.mxu0 0.0
    %330 = vmatprep.subr.mxu0 0.0
    %331 = vmatpush1.msra.mxu0 0.0
    %332 = vmatprep.subr.mxu0 0.0
    %333 = vmatpush1.msra.mxu0 0.0
    %334 = vmatprep.subr.mxu0 0.0
    %335 = vmatpush1.msra.mxu0 0.0
    %336 = vmatprep.subr.mxu0 0.0
    %337 = vmatpush1.msra.mxu0 0.0
    %338 = vmatprep.subr.mxu0 0.0
    %339 = vmatpush1.msra.mxu0 0.0
    %340 = vmatprep.subr.mxu0 0.0
    %341 = vmatpush1.msra.mxu0 0.0
    %342 = vmatprep.subr.mxu0 0.0
    %343 = vmatpush1.msra.mxu0 0.0
    %344 = vmatprep.subr.mxu0 0.0
    %345 = vmatpush1.msra.mxu0 0.0
    %346 = vmatprep.subr.mxu0 0.0
    %347 = vmatpush1.msra.mxu0 0.0
    %348 = vmatprep.subr.mxu0 0.0
    %349 = vmatpush1.msra.mxu0 0.0
    %350 = vmatprep.subr.mxu0 0.0
    %351 = vmatpush1.msra.mxu0 0.0
    %352 = vmatprep.subr.mxu0 0.0
    %353 = vmatpush1.msra.mxu0 0.0
    %354 = vmatprep.subr.mxu0 0.0
    %355 = vmatpush1.msra.mxu0 0.0
    %356 = vmatprep.subr.mxu0 0.0
    %357 = vmatpush1.msra.mxu0 0.0
    %358 = vmatprep.subr.mxu0 0.0
    %359 = vmatpush1.msra.mxu0 0.0
    %360 = vmatprep.subr.mxu0 0.0
    %361 = vmatpush1.msra.mxu0 0.0
    %362 = vmatprep.subr.mxu0 0.0
    %363 = vmatpush1.msra.mxu0 0.0
    %364 = vmatprep.subr.mxu0 0.0
    %365 = vmatpush1.msra.mxu0 0.0
    %366 = vmatprep.subr.mxu0 0.0
    %367 = vmatpush1.msra.mxu0 0.0
    %368 = vmatprep.subr.mxu0 0.0
    %369 = vmatpush1.msra.mxu0 0.0
    %370 = vmatprep.subr.mxu0 0.0
    %371 = vmatpush1.msra.mxu0 0.0
    %372 = vmatprep.subr.mxu0 0.0
    %373 = vmatpush1.msra.mxu0 0.0
    %374 = vmatprep.subr.mxu0 0.0
    %375 = vmatpush1.msra.mxu0 0.0
    %376 = vmatprep.subr.mxu0 0.0
    %377 = vmatpush1.msra.mxu0 0.0
    %378 = vmatprep.subr.mxu0 0.0
    %379 = vmatpush1.msra.mxu0 0.0
    %380 = vmatprep.subr.mxu0 0.0
    %381 = vmatpush1.msra.mxu0 0.0
    %382 = vmatprep.subr.mxu0 0.0
    %383 = vmatpush1.msra.mxu0 0.0
    %384 = vmatprep.subr.mxu0 0.0
    %385 = vmatpush1.msra.mxu0 0.0
    %386 = vmatprep.subr.mxu0 0.0
    %387 = vmatpush1.msra.mxu0 0.0
    %388 = vmatprep.subr.mxu0 0.0
    %389 = vmatpush1.msra.mxu0 0.0
    %390 = vmatprep.mubr.f32.mxu0 0.0
    %391 = vmatmul.mubr.f32.gmra.mrb[0].mxu0 %v120
    %v392 = vpop.f32.mrb[0].mxu0
    %v393 = vadd.f32 %v99, %v392
    %v394 = vpop.f32.mrb[0].mxu0
    %v395 = vadd.f32 %v99, %v394
    %396 = vmatprep.mubr.f32.mxu0 0.0
    %397 = vmatmul.mubr.f32.gmra.mrb[0].mxu0 %v123
    %v398 = vpop.f32.mrb[0].mxu0
    %v399 = vadd.f32 %v104, %v398
    %v400 = vpop.f32.mrb[0].mxu0
    %v401 = vadd.f32 %v104, %v400
    %402 = vmatprep.mubr.f32.mxu0 0.0
    %403 = vmatmul.mubr.f32.gmra.mrb[0].mxu0 %v126
    %v404 = vpop.f32.mrb[0].mxu0
    %v405 = vadd.f32 %v109, %v404
    %v406 = vpop.f32.mrb[0].mxu0
    %v407 = vadd.f32 %v109, %v406
    %408 = vmatprep.mubr.f32.mxu0 0.0
    %409 = vmatmul.mubr.f32.gmra.mrb[0].mxu0 %v129
    %v410 = vpop.f32.mrb[0].mxu0
    %v411 = vadd.f32 %v114, %v410
    %v412 = vpop.f32.mrb[0].mxu0
    %v413 = vadd.f32 %v114, %v412
    %414 = vdwg.mxu0
    %v415 = vmax.f32 %v393, 0.0
    %v416 = vmax.f32 %v395, 0.0
    %v417 = vmax.f32 %v399, 0.0
    %v418 = vmax.f32 %v401, 0.0
    %v419 = vmax.f32 %v405, 0.0
    %v420 = vmax.f32 %v407, 0.0
    %v421 = vmax.f32 %v411, 0.0
    %v422 = vmax.f32 %v413, 0.0
    %423 = vmatprep.subr.mxu0 %v416
    %424 = vmatpush1.msra.mxu0 %v415
    %425 = vmatprep.subr.mxu0 %v418
    %426 = vmatpush1.msra.mxu0 %v417
    %427 = vmatprep.subr.mxu0 %v420
    %428 = vmatpush1.msra.mxu0 %v419
    %429 = vmatprep.subr.mxu0 %v422
    %430 = vmatpush1.msra.mxu0 %v421
    %431 = vmatprep.subr.mxu0 0.0
    %432 = vmatpush1.msra.mxu0 0.0
    %433 = vmatprep.subr.mxu0 0.0
    %434 = vmatpush1.msra.mxu0 0.0
    %435 = vmatprep.subr.mxu0 0.0
    %436 = vmatpush1.msra.mxu0 0.0
    %437 = vmatprep.subr.mxu0 0.0
    %438 = vmatpush1.msra.mxu0 0.0
    %439 = vmatprep.subr.mxu0 0.0
    %440 = vmatpush1.msra.mxu0 0.0
    %441 = vmatprep.subr.mxu0 0.0
    %442 = vmatpush1.msra.mxu0 0.0
    %443 = vmatprep.subr.mxu0 0.0
    %444 = vmatpush1.msra.mxu0 0.0
    %445 = vmatprep.subr.mxu0 0.0
    %446 = vmatpush1.msra.mxu0 0.0
    %447 = vmatprep.subr.mxu0 0.0
    %448 = vmatpush1.msra.mxu0 0.0
    %449 = vmatprep.subr.mxu0 0.0
    %450 = vmatpush1.msra.mxu0 0.0
    %451 = vmatprep.subr.mxu0 0.0
    %452 = vmatpush1.msra.mxu0 0.0
    %453 = vmatprep.subr.mxu0 0.0
    %454 = vmatpush1.msra.mxu0 0.0
    %455 = vmatprep.subr.mxu0 0.0
    %456 = vmatpush1.msra.mxu0 0.0
    %457 = vmatprep.subr.mxu0 0.0
    %458 = vmatpush1.msra.mxu0 0.0
    %459 = vmatprep.subr.mxu0 0.0
    %460 = vmatpush1.msra.mxu0 0.0
    %461 = vmatprep.subr.mxu0 0.0
    %462 = vmatpush1.msra.mxu0 0.0
    %463 = vmatprep.subr.mxu0 0.0
    %464 = vmatpush1.msra.mxu0 0.0
    %465 = vmatprep.subr.mxu0 0.0
    %466 = vmatpush1.msra.mxu0 0.0
    %467 = vmatprep.subr.mxu0 0.0
    %468 = vmatpush1.msra.mxu0 0.0
    %469 = vmatprep.subr.mxu0 0.0
    %470 = vmatpush1.msra.mxu0 0.0
    %471 = vmatprep.subr.mxu0 0.0
    %472 = vmatpush1.msra.mxu0 0.0
    %473 = vmatprep.subr.mxu0 0.0
    %474 = vmatpush1.msra.mxu0 0.0
    %475 = vmatprep.subr.mxu0 0.0
    %476 = vmatpush1.msra.mxu0 0.0
    %477 = vmatprep.subr.mxu0 0.0
    %478 = vmatpush1.msra.mxu0 0.0
    %479 = vmatprep.subr.mxu0 0.0
    %480 = vmatpush1.msra.mxu0 0.0
    %481 = vmatprep.subr.mxu0 0.0
    %482 = vmatpush1.msra.mxu0 0.0
    %483 = vmatprep.subr.mxu0 0.0
    %484 = vmatpush1.msra.mxu0 0.0
    %485 = vmatprep.subr.mxu0 0.0
    %486 = vmatpush1.msra.mxu0 0.0
    %487 = vmatprep.mubr.f32.mxu0 0.0
    %488 = vmatmul.mubr.f32.gmra.mrb[0].mxu0 %v240
    %v489 = vpop.f32.mrb[0].mxu0
    %v490 = vadd.f32 %v236, %v489
    %v491 = vpop.f32.mrb[0].mxu0
    %v492 = vadd.f32 %v236, %v491
    %493 = vdwg.mxu0
    %v496 = vcombine.low %v490, %v492
    %s498 = scalar_lea.vmem [#allocation11], 8
    %499 = vst [vmem:[%s498] sm:$0xff] %v496
    // Predicated region
    $region42: #{tpu_custom_call.1} parent=1 // pred_check
      _
    $region43: #{tpu_custom_call.1} parent=1 // pred_check_branch
      %501 = sbr.rel (0) target = $region45
    $region44: #{tpu_custom_call.1} parent=1 // pred_region
      %s503 = ssub.s32 256, 256
      %504 = vsyncadd [#allocation4], %s503
      %s505 = sshll.u32 [#allocation11], 4
      %s506 = int_to_ptr.vmem [resolvable:$true] %s505
      %511 = dma.vmem_to_hbm [thread:$0]  %s506, 256, %s5, [#allocation4], 128, 128, 8
    $region45: #{tpu_custom_call.1} parent=1 // pred_fallthru
      _
    // Predicated region
    $region46: #{tpu_custom_call.1} parent=1 // pred_check
      _
    $region47: #{tpu_custom_call.1} parent=1 // pred_check_branch
      %513 = sbr.rel (0) target = $region49
    $region48: #{tpu_custom_call.1} parent=1 // pred_region
      %514 = dma.done [#allocation4], 256
    $region49: #{tpu_custom_call.1} parent=1 // pred_fallthru
      _
    %515 = vsyncpa [#allocation3], 1
    %516 = vsyncpa [#allocation6], 1
    %517 = vsyncpa [#allocation9], 1
    %518 = vsyncpa [#allocation4], 1

</llo_original>
